<compile_context>
chip_gen: v6e
topology: v6e:2x2x1
jax: 0.10.0
libtpu: 0.0.40
codegen_flags: <defaults>
</compile_context>

<pallas_src>
import functools

import jax
import jax.numpy as jnp
from jax.experimental import pallas as pl
from jax.experimental.pallas import tpu as pltpu

EPS = 1e-5


@functools.cache
def _roll_matches_numpy() -> bool:
    """pltpu.roll is documented to match jnp.roll; verify once at runtime and
    adapt the shift sign if the convention ever differs (cheap insurance)."""
    def k(x_ref, o_ref):
        o_ref[...] = pltpu.roll(x_ref[...], 1, 1)

    x = jnp.arange(8 * 128, dtype=jnp.float32).reshape(8, 128)
    out = pl.pallas_call(
        k, out_shape=jax.ShapeDtypeStruct((8, 128), jnp.float32))(x)
    return bool(jnp.array_equal(out, jnp.roll(x, 1, 1)))


def _up_kernel(c_ref, x_ref, w1_ref, w2_ref, aff_ref, m_ref, o_ref, xc_ref,
               *, roll_shifts, cc, cx, cout):
    """One batch element per grid step.  All tensors are (C, H*W): lane-dense."""
    cin = cc + cx

    # Pack concat([concat_input, x], channel dim) ONCE into a VMEM scratch so
    # conv1 runs one full-K dot per tap instead of two half-utilized K-split
    # dots.  No HBM concat round trip.
    xc_ref[0:cc, :] = c_ref[0]
    xc_ref[cc:cin, :] = x_ref[0]
    xc = xc_ref[...]                                      # (Cin, HW)

    # Hoist the 8 boundary masks out of the per-tap loops (reused by both convs).
    # NOTE: masks assume the block covers the FULL flattened image; any future
    # spatial tiling must add halos or these become wrong at tile seams.
    masks = [None if s is None else m_ref[t:t + 1, :]
             for t, s in enumerate(roll_shifts)]

    def conv3x3(w_ref, x_in):
        # kn2row conv, one tap at a time: small MXU dot -> lane roll (XLU slot)
        # -> zero-padding mask -> accumulate into a single (Cout_pad, HW) value.
        acc = None
        for t, s in enumerate(roll_shifts):
            zt = jnp.dot(w_ref[t], x_in, preferred_element_type=jnp.float32)
            if s is not None:
                # shifted[p] = z_t[p + offset]; wrap-around is killed by the mask.
                zt = pltpu.roll(zt, s, 1) * masks[t]
            acc = zt if acc is None else acc + zt
        return acc

    def inorm_relu(a, col):
        # Two-pass variance (robust when |mean| >> std); rsqrt on the EUP;
        # affine folded into a per-channel scale -> per-pixel work is
        # d*scale + b followed by the ReLU max.
        mean = jnp.mean(a, axis=1, keepdims=True)
        d = a - mean
        var = jnp.mean(d * d, axis=1, keepdims=True)
        scale = jax.lax.rsqrt(var + EPS) * aff_ref[:, col:col + 1]
        return jnp.maximum(d * scale + aff_ref[:, col + 1:col + 2], 0.0)

    # Conv biases omitted on purpose (cancelled by the InstanceNorm mean).
    h1 = inorm_relu(conv3x3(w1_ref, xc), 0)               # (Cout_pad, HW)
    h2 = inorm_relu(conv3x3(w2_ref, h1), 2)               # (Cout_pad, HW)

    if h2.shape[0] != cout:                               # only if Cout was padded
        h2 = h2[:cout, :]
    o_ref[0] = h2.astype(o_ref.dtype)                     # lane-dense store


def up_forward(x_nchw, concat_nchw, params):
    N, Cx, H, W = x_nchw.shape
    Cc = concat_nchw.shape[1]
    Cin = Cc + Cx
    Cout = params["w2"].shape[0]
    HW = H * W
    assert HW % 128 == 0, "flattened spatial extent must be a multiple of 128"
    cout_pad = max(8, ((Cout + 7) // 8) * 8)

    # Free contiguous reshapes (no transpose, no concat round-trip in HBM).
    x_f = x_nchw.reshape(N, Cx, HW).astype(jnp.float32)
    c_f = concat_nchw.reshape(N, Cc, HW).astype(jnp.float32)

    # PyTorch conv weight (Cout, Cin, 3, 3) -> tap-major (9, Cout, K), then
    # zero-pad output channels (and conv2's K) to a sublane multiple of 8.
    def prep_w(w, k_in, k_pad):
        w9 = jnp.transpose(w, (2, 3, 0, 1)).reshape(9, Cout, k_in)
        return jnp.pad(w9.astype(jnp.float32),
                       ((0, 0), (0, cout_pad - Cout), (0, k_pad - k_in)))

    w1 = prep_w(params["w1"], Cin, Cin)                   # (9, Cout_pad, Cin)
    w2 = prep_w(params["w2"], Cout, cout_pad)             # (9, Cout_pad, Cout_pad)
    # NOTE: conv biases b1/b2 are intentionally NOT passed (see header comment).

    # Affine params packed into one (Cout_pad, 4) tile: [g1, be1, g2, be2];
    # padded rows get g=0, b=0 so padded channels stay exactly zero.
    aff = jnp.stack([params["g1"], params["be1"], params["g2"], params["be2"]],
                    axis=1).astype(jnp.float32)
    aff = jnp.pad(aff, ((0, cout_pad - Cout), (0, 0)))

    # Per-tap flat lane shifts and zero-padding validity masks over output pixels.
    matches = _roll_matches_numpy()
    yy, xx = jnp.divmod(jnp.arange(HW, dtype=jnp.int32), W)
    roll_shifts, masks = [], []
    for ky in range(3):
        for kx in range(3):
            dy, dx = ky - 1, kx - 1
            s = dy * W + dx                                # flat spatial offset
            roll_shifts.append(None if s == 0 else
                               ((-s) % HW if matches else s % HW))
            valid = ((yy + dy >= 0) & (yy + dy < H) &
                     (xx + dx >= 0) & (xx + dx < W))
            masks.append(valid.astype(jnp.float32))
    masks = jnp.stack(masks, axis=0)                       # (9, HW)

    kernel = functools.partial(_up_kernel, roll_shifts=tuple(roll_shifts),
                               cc=Cc, cx=Cx, cout=Cout)

    # Explicit VMEM budget from the actual resident buffers (double-buffered
    # in/out blocks + weights/masks + xc scratch + live conv/norm intermediates),
    # with a 2x safety margin, floored at 32 MiB and kept under physical VMEM.
    resident_f32 = (2 * (Cc + Cx + Cout) * HW
                    + 2 * (9 * cout_pad * (Cin + cout_pad) + 4 * cout_pad + 9 * HW)
                    + Cin * HW
                    + 6 * cout_pad * HW)
    vmem_limit = int(min(max(resident_f32 * 4 * 2, 32 << 20), 100 << 20))

    out = pl.pallas_call(
        kernel,
        out_shape=jax.ShapeDtypeStruct((N, Cout, HW), jnp.float32),
        grid_spec=pltpu.PrefetchScalarGridSpec(
            num_scalar_prefetch=0,
            grid=(N,),
            in_specs=[
                pl.BlockSpec((1, Cc, HW), lambda n: (n, 0, 0)),
                pl.BlockSpec((1, Cx, HW), lambda n: (n, 0, 0)),
                pl.BlockSpec((9, cout_pad, Cin), lambda n: (0, 0, 0)),
                pl.BlockSpec((9, cout_pad, cout_pad), lambda n: (0, 0, 0)),
                pl.BlockSpec((cout_pad, 4), lambda n: (0, 0)),
                pl.BlockSpec((9, HW), lambda n: (0, 0)),
            ],
            out_specs=pl.BlockSpec((1, Cout, HW), lambda n: (n, 0, 0)),
            scratch_shapes=[pltpu.VMEM((Cin, HW), jnp.float32)],
        ),
        compiler_params=pltpu.CompilerParams(
            dimension_semantics=("parallel",),             # batch -> both TCs on v7x
            vmem_limit_bytes=vmem_limit),
    )(c_f, x_f, w1, w2, aff, masks)

    return out.reshape(N, Cout, H, W)                      # free reshape (NCHW)


# ---------------- pure-JAX reference (for verification only) ----------------
def _ref_forward(x_nchw, concat_nchw, params):
    xc = jnp.concatenate([concat_nchw, x_nchw], axis=1)

    def conv(x, w, b):
        y = jax.lax.conv_general_dilated(
            x, w, window_strides=(1, 1), padding=((1, 1), (1, 1)),
            dimension_numbers=("NCHW", "OIHW", "NCHW"))
        return y + b[None, :, None, None]

    def inorm(x, g, be):
        mean = jnp.mean(x, axis=(2, 3), keepdims=True)
        var = jnp.mean((x - mean) ** 2, axis=(2, 3), keepdims=True)
        y = (x - mean) / jnp.sqrt(var + EPS)
        return y * g[None, :, None, None] + be[None, :, None, None]

    h = jnp.maximum(inorm(conv(xc, params["w1"], params["b1"]),
                          params["g1"], params["be1"]), 0.0)
    h = jnp.maximum(inorm(conv(h, params["w2"], params["b2"]),
                          params["g2"], params["be2"]), 0.0)
    return h


if __name__ == "__main__":
    # Small shapes: Up(in_chans=4, out_chans=8, bias=True)
    N, Cx, Cc, H, W = 2, 2, 2, 16, 16
    Cin, Cout = Cx + Cc, 8

    key = jax.random.PRNGKey(0)
    ks = jax.random.split(key, 12)
    x = jax.random.normal(ks[0], (N, Cx, H, W), jnp.float32)
    concat_input = jax.random.normal(ks[1], (N, Cc, H, W), jnp.float32)

    params = {
        "w1": 0.1 * jax.random.normal(ks[2], (Cout, Cin, 3, 3), jnp.float32),
        "b1": 0.1 * jax.random.normal(ks[3], (Cout,), jnp.float32),
        "g1": 1.0 + 0.1 * jax.random.normal(ks[4], (Cout,), jnp.float32),
        "be1": 0.1 * jax.random.normal(ks[5], (Cout,), jnp.float32),
        "w2": 0.1 * jax.random.normal(ks[6], (Cout, Cout, 3, 3), jnp.float32),
        "b2": 0.1 * jax.random.normal(ks[7], (Cout,), jnp.float32),
        "g2": 1.0 + 0.1 * jax.random.normal(ks[8], (Cout,), jnp.float32),
        "be2": 0.1 * jax.random.normal(ks[9], (Cout,), jnp.float32),
    }

    out = up_forward(x, concat_input, params)
    out = jax.block_until_ready(out)

    ref = _ref_forward(x, concat_input, params)
    assert out.shape == (N, Cout, H, W), out.shape
    err = float(jnp.max(jnp.abs(out - ref)))
    assert err < 1e-4, err

    print("KERNEL_OK")
</pallas_src>

<mosaic_0001>
module attributes {stable_mosaic.version = 11 : i64} {
  func.func @k(%arg0: memref<8x128xf32, #tpu.memory_space<vmem>>, %arg1: memref<8x128xf32, #tpu.memory_space<vmem>>) attributes {dimension_semantics = [], scalar_prefetch = 0 : i64, scratch_operands = 0 : i64, tpu.core_type = #tpu.core_type<tc>} {
    %c0 = arith.constant 0 : index
    %c0_0 = arith.constant 0 : index
    %0 = vector.load %arg0[%c0, %c0_0] : memref<8x128xf32, #tpu.memory_space<vmem>>, vector<8x128xf32>
    %c1_i32 = arith.constant 1 : i32
    %1 = tpu.dynamic_rotate %0 by %c1_i32 dim 1 : vector<8x128xf32>, i32 -> vector<8x128xf32>
    %c0_1 = arith.constant 0 : index
    %c0_2 = arith.constant 0 : index
    %2 = vector.load %arg1[%c0_1, %c0_2] : memref<8x128xf32, #tpu.memory_space<vmem>>, vector<8x128xf32>
    tpu.vector_store %arg1[%c0_1, %c0_2], %1 {strides = array<i32>} : memref<8x128xf32, #tpu.memory_space<vmem>>, vector<8x128xf32>,
    return
  }
}

</mosaic_0001>

<llo_original>
// kernel: tpu_custom_call.1
$region0: #{tpu_custom_call.1}
  #allocation0 [shape = 'u32[]', space=smem, size = 0x4, offset = 0x4, fixed_abs, tag = 'smem constant byte address 0x4 - core index']
  #allocation1 [shape = 'u32[144,128]{1,0:T(1,128)}', space=vmem, size = 0x12000, scoped, tag = 'internal scratch']
  %s0 = inlined_call_operand.hbm [shape: f32[8,128], index: 0, kind: input, shape index: {}]
  %s1 = inlined_call_operand.hbm [shape: f32[8,128], index: 1, kind: output, shape index: {}]
  %s2 = sld [smem:[#allocation0]]
  $region18: #{tpu_custom_call.1} parent=0
    _
  %s4 = ssub.s32 1, %s2
  %s5 = scalar_select 0, %s4, %s2
  $region1: #{tpu_custom_call.1} parent=0
    #allocation2 [shape = 'u8[4096]{0}', space=vmem, size = 0x1000, scoped, tag = 'input window, operand 0, single buffered']
    #allocation3 [shape = 's32[1]{0}', space=sflag, size = 0x4, scoped, tag = 'scoped memory for tpu_custom_call.1']
    #allocation4 [shape = 's32[1]{0}', space=sflag, size = 0x4, scoped, tag = 'scoped memory for tpu_custom_call.1']
    #allocation5 [shape = 'u8[4096]{0}', space=vmem, size = 0x1000, scoped, tag = 'output window, operand 0, single buffered']
    %6 = vsyncpa [#allocation3], 0
    %7 = vsyncpa [#allocation4], 0
    // Predicated region
    $region2: #{tpu_custom_call.1} parent=1 // pred_check
      _
    $region3: #{tpu_custom_call.1} parent=1 // pred_check_branch
      %9 = sbr.rel (0) target = $region5
    $region4: #{tpu_custom_call.1} parent=1 // pred_region
      %s11 = ssub.s32 128, 128
      %12 = vsyncadd [#allocation3], %s11
      %s14 = sshll.u32 [#allocation2], 4
      %s15 = int_to_ptr.vmem [resolvable:$true] %s14
      %17 = dma.hbm_to_vmem [thread:$0]  %s0, 128, %s15, [#allocation3]
    $region5: #{tpu_custom_call.1} parent=1 // pred_fallthru
      _
    // Predicated region
    $region6: #{tpu_custom_call.1} parent=1 // pred_check
      _
    $region7: #{tpu_custom_call.1} parent=1 // pred_check_branch
      %19 = sbr.rel (0) target = $region9
    $region8: #{tpu_custom_call.1} parent=1 // pred_region
      %20 = dma.done [#allocation3], 128
    $region9: #{tpu_custom_call.1} parent=1 // pred_fallthru
      _
    %v21 = vld [vmem:[#allocation2] sm:$0xff]
    %22 = vrot.lane.b32.xlu0 %v21, 1
    %v23 = vpop.permute.xlu0 %22
    %24 = vst [vmem:[#allocation5] sm:$0xff] %v23
    // Predicated region
    $region10: #{tpu_custom_call.1} parent=1 // pred_check
      _
    $region11: #{tpu_custom_call.1} parent=1 // pred_check_branch
      %26 = sbr.rel (0) target = $region13
    $region12: #{tpu_custom_call.1} parent=1 // pred_region
      %s28 = ssub.s32 128, 128
      %29 = vsyncadd [#allocation4], %s28
      %s31 = sshll.u32 [#allocation5], 4
      %s32 = int_to_ptr.vmem [resolvable:$true] %s31
      %34 = dma.vmem_to_hbm [thread:$0]  %s32, 128, %s1, [#allocation4]
    $region13: #{tpu_custom_call.1} parent=1 // pred_fallthru
      _
    // Predicated region
    $region14: #{tpu_custom_call.1} parent=1 // pred_check
      _
    $region15: #{tpu_custom_call.1} parent=1 // pred_check_branch
      %36 = sbr.rel (0) target = $region17
    $region16: #{tpu_custom_call.1} parent=1 // pred_region
      %37 = dma.done [#allocation4], 128
    $region17: #{tpu_custom_call.1} parent=1 // pred_fallthru
      _
    %38 = vsyncpa [#allocation3], 1
    %39 = vsyncpa [#allocation4], 1

</llo_original>
